<compile_context>
chip_gen: v7x
topology: tpu7x:2x2x1
jax: 0.10.0
libtpu: 0.0.40
codegen_flags: <defaults>
</compile_context>

<pallas_src>
import math

import jax
import jax.numpy as jnp
from jax.experimental import pallas as pl
from jax.experimental.pallas import tpu as pltpu


def _copy_block_kernel(x_ref, o_ref):
    # Pure identity copy of one lane-dense (bm, cols) VMEM tile.  No slicing,
    # no re-layout: the squeeze already happened as a free reshape outside.
    o_ref[...] = x_ref[...]


def _pick_cols(total):
    """Largest lane-dense column count (multiple of 128) dividing `total`."""
    for c in (2048, 1024, 512, 256, 128):
        if total % c == 0:
            return c
    return None


def squeeze_dim1(x: jax.Array, *, max_block_bytes: int = 2 * 1024 * 1024) -> jax.Array:
    """Equivalent of torch.squeeze(x, dim=1)."""
    if x.ndim < 2 or x.shape[1] != 1:
        # torch.squeeze(x, dim=1) is a no-op when dim 1 is not of size 1.
        return x

    out_dims = x.shape[:1] + x.shape[2:]
    total = math.prod(x.shape)
    itemsize = jnp.dtype(x.dtype).itemsize

    cols = _pick_cols(total)
    if cols is None or total == 0:
        # Ragged / empty sizes: squeezing a size-1 dim of a contiguous array
        # is a pure metadata change; let XLA do the free (no-copy) reshape.
        return x.reshape(out_dims)

    rows = total // cols

    # Sublane granule for the second-to-last block dim (f32:8, bf16:16, i8:32).
    granule = max(8, 32 // itemsize)

    # Cap per-block footprint (~2 MiB) so in+out double-buffers fit easily in
    # scoped VMEM on all generations (v5e default 16 MiB, v6e/v7x 32 MiB).
    bm_cap = max(granule, max_block_bytes // (cols * itemsize))
    bm = min(rows, bm_cap)
    if bm < rows:
        bm = max(granule, (bm // granule) * granule)
    grid = pl.cdiv(rows, bm)

    # Lane-dense 2-D view of the contiguous data: free metadata reshape.
    x2d = x.reshape(rows, cols)

    y2d = pl.pallas_call(
        _copy_block_kernel,
        out_shape=jax.ShapeDtypeStruct((rows, cols), x.dtype),
        grid_spec=pltpu.PrefetchScalarGridSpec(
            num_scalar_prefetch=0,
            grid=(grid,),
            in_specs=[pl.BlockSpec((bm, cols), lambda i: (i, 0))],
            out_specs=pl.BlockSpec((bm, cols), lambda i: (i, 0)),
        ),
        compiler_params=pltpu.CompilerParams(
            dimension_semantics=("parallel",),
        ),
    )(x2d)

    return y2d.reshape(out_dims)


if __name__ == "__main__":
    root = jax.random.PRNGKey(0)
    k0, k1, k2, k3 = jax.random.split(root, 4)

    # 1) Squeeze-active case: NCHW with C == 1 (small shape).
    x = jax.random.normal(k0, (2, 1, 16, 16), dtype=jnp.float32)
    y = jax.block_until_ready(squeeze_dim1(x))
    assert y.shape == (2, 16, 16), y.shape
    assert y.dtype == x.dtype
    assert jnp.array_equal(y, jnp.squeeze(x, axis=1))

    # 2) Multi-block grid (exercises the pipelined tiled path): force small
    #    blocks so grid > 1 even at a modest shape.
    x_big = jax.random.normal(k1, (8, 1, 64, 512), dtype=jnp.float32)
    y_big = jax.block_until_ready(squeeze_dim1(x_big, max_block_bytes=64 * 1024))
    assert y_big.shape == (8, 64, 512)
    assert jnp.array_equal(y_big, jnp.squeeze(x_big, axis=1))

    # 3) bf16 path (sublane granule 16).
    x_bf16 = jax.random.normal(k2, (4, 1, 32, 128), dtype=jnp.bfloat16)
    y_bf16 = jax.block_until_ready(squeeze_dim1(x_bf16))
    assert y_bf16.shape == (4, 32, 128)
    assert y_bf16.dtype == jnp.bfloat16
    assert jnp.array_equal(y_bf16, jnp.squeeze(x_bf16, axis=1))

    # 4) No-op path: dim 1 is not size 1 -> returned unchanged.
    x_noop = jax.random.normal(k3, (2, 4, 16, 16), dtype=jnp.float32)
    y_noop = jax.block_until_ready(squeeze_dim1(x_noop))
    assert y_noop.shape == x_noop.shape
    assert jnp.array_equal(y_noop, x_noop)

    print("KERNEL_OK")
</pallas_src>

<mosaic_0001>
module attributes {stable_mosaic.version = 11 : i64} {
  func.func @_copy_block_kernel(%arg0: i32, %arg1: memref<1x512xf32, #tpu.memory_space<vmem>>, %arg2: memref<1x512xf32, #tpu.memory_space<vmem>>) attributes {dimension_semantics = [#tpu.dimension_semantics<parallel>], iteration_bounds = array<i64: 1>, scalar_prefetch = 0 : i64, scratch_operands = 0 : i64, tpu.core_type = #tpu.core_type<tc>, window_params = [{transform_indices = @transform_0, window_bounds = array<i64: 1, 512>}, {transform_indices = @transform_1, window_bounds = array<i64: 1, 512>}]} {
    %c0 = arith.constant 0 : index
    %c0_0 = arith.constant 0 : index
    %0 = vector.load %arg1[%c0, %c0_0] : memref<1x512xf32, #tpu.memory_space<vmem>>, vector<1x512xf32>
    %c0_1 = arith.constant 0 : index
    %c0_2 = arith.constant 0 : index
    %1 = vector.load %arg2[%c0_1, %c0_2] : memref<1x512xf32, #tpu.memory_space<vmem>>, vector<1x512xf32>
    tpu.vector_store %arg2[%c0_1, %c0_2], %0 {strides = array<i32>} : memref<1x512xf32, #tpu.memory_space<vmem>>, vector<1x512xf32>,
    return
  }
  func.func @transform_0(%arg0: i32) -> (i32, i32) {
    %c0_i32 = arith.constant 0 : i32
    %c0_i32_0 = arith.constant 0 : i32
    return %arg0, %c0_i32 : i32, i32
  }
  func.func @transform_1(%arg0: i32) -> (i32, i32) {
    %c0_i32 = arith.constant 0 : i32
    %c0_i32_0 = arith.constant 0 : i32
    return %arg0, %c0_i32 : i32, i32
  }
}

</mosaic_0001>

<llo_original>
// kernel: tpu_custom_call.1
$region0: #{tpu_custom_call.1}
  #allocation0 [shape = 'u32[]', space=smem, size = 0x4, offset = 0x4, fixed_abs, tag = 'smem constant byte address 0x4 - core index']
  #allocation1 [shape = 'u32[144,128]{1,0:T(1,128)}', space=vmem, size = 0x12000, scoped, tag = 'internal scratch']
  %s0 = inlined_call_operand.hbm [shape: f32[1,512], index: 0, kind: input, shape index: {}]
  %s1 = inlined_call_operand.hbm [shape: f32[1,512], index: 1, kind: output, shape index: {}]
  %s2 = sld [smem:[#allocation0]]
  $region18: #{tpu_custom_call.1} parent=0
    _
  %s4 = ssub.s32 1, %s2
  %s5 = scalar_select 0, %s4, %s2
  $region1: #{tpu_custom_call.1} parent=0
    #allocation2 [shape = 'u8[2048]{0}', space=vmem, size = 0x800, scoped, tag = 'input window, operand 0, single buffered']
    #allocation3 [shape = 's32[1]{0}', space=sflag, size = 0x4, scoped, tag = 'scoped memory for tpu_custom_call.1']
    #allocation4 [shape = 's32[1]{0}', space=sflag, size = 0x4, scoped, tag = 'scoped memory for tpu_custom_call.1']
    #allocation5 [shape = 'u8[2048]{0}', space=vmem, size = 0x800, scoped, tag = 'output window, operand 0, single buffered']
    %6 = vsyncpa [#allocation3], 0
    %7 = vsyncpa [#allocation4], 0
    // Predicated region
    $region2: #{tpu_custom_call.1} parent=1 // pred_check
      _
    $region3: #{tpu_custom_call.1} parent=1 // pred_check_branch
      %9 = sbr.rel (0) target = $region5
    $region4: #{tpu_custom_call.1} parent=1 // pred_region
      %s11 = ssub.s32 64, 64
      %12 = vsyncadd [#allocation3], %s11
      %s14 = sshll.u32 [#allocation2], 4
      %s15 = int_to_ptr.vmem [resolvable:$true] %s14
      %17 = dma.hbm_to_vmem [thread:$0]  %s0, 64, %s15, [#allocation3]
    $region5: #{tpu_custom_call.1} parent=1 // pred_fallthru
      _
    // Predicated region
    $region6: #{tpu_custom_call.1} parent=1 // pred_check
      _
    $region7: #{tpu_custom_call.1} parent=1 // pred_check_branch
      %19 = sbr.rel (0) target = $region9
    $region8: #{tpu_custom_call.1} parent=1 // pred_region
      %20 = dma.done [#allocation3], 64
    $region9: #{tpu_custom_call.1} parent=1 // pred_fallthru
      _
    %v21 = vld [vmem:[#allocation2] sm:$0xf]
    %v22 = vlaneseq
    %vm23 = vcmp.ge.s32.totalorder %v22, 0
    %vm24 = vcmp.lt.s32.totalorder %v22, 512
    %vm25 = vmand %vm23, %vm24
    %26 = vst.msk [vmem:[#allocation5] sm:$0xf] %vm25, %v21
    // Predicated region
    $region10: #{tpu_custom_call.1} parent=1 // pred_check
      _
    $region11: #{tpu_custom_call.1} parent=1 // pred_check_branch
      %28 = sbr.rel (0) target = $region13
    $region12: #{tpu_custom_call.1} parent=1 // pred_region
      %s30 = ssub.s32 64, 64
      %31 = vsyncadd [#allocation4], %s30
      %s33 = sshll.u32 [#allocation5], 4
      %s34 = int_to_ptr.vmem [resolvable:$true] %s33
      %36 = dma.vmem_to_hbm [thread:$0]  %s34, 64, %s1, [#allocation4]
    $region13: #{tpu_custom_call.1} parent=1 // pred_fallthru
      _
    // Predicated region
    $region14: #{tpu_custom_call.1} parent=1 // pred_check
      _
    $region15: #{tpu_custom_call.1} parent=1 // pred_check_branch
      %38 = sbr.rel (0) target = $region17
    $region16: #{tpu_custom_call.1} parent=1 // pred_region
      %39 = dma.done [#allocation4], 64
    $region17: #{tpu_custom_call.1} parent=1 // pred_fallthru
      _
    %40 = vsyncpa [#allocation3], 1
    %41 = vsyncpa [#allocation4], 1

</llo_original>
